<compile_context>
chip_gen: v5e
topology: v5e:2x2
jax: 0.10.0
libtpu: 0.0.40
codegen_flags: <defaults>
</compile_context>

<pallas_src>
import jax
import jax.numpy as jnp
from jax.experimental import pallas as pl
from jax.experimental.pallas import tpu as pltpu

IN_FEATURES = 784
HIDDEN = 20
HIDDEN_PAD = 128        # zero-pad hidden to one full lane group
NUM_CLASSES = 10
TB_MAX = 256            # batch rows per grid step (multiple of 8)


# ----------------------------- Pallas kernel ------------------------------- #

def mlp_kernel(x_ref, w1_ref, b1_ref, w2_ref, b2_ref, o_ref):
    # x_ref : (TB, 784)        one batch tile
    # w1_ref: (784, 128)       fc weight (transposed, hidden zero-padded)
    # b1_ref: (1, 128)         fc bias (zero-padded)
    # w2_ref: (128, NC)        fc2 weight (transposed, zero rows for padding)
    # b2_ref: (1, NC)
    h = jnp.dot(x_ref[...], w1_ref[...], preferred_element_type=jnp.float32)
    h = jnp.maximum(h + b1_ref[...], 0.0)                 # (TB, 128) lane-dense
    o_ref[...] = (jnp.dot(h, w2_ref[...], preferred_element_type=jnp.float32)
                  + b2_ref[...])


# ----------------------------- Pallas wrapper ------------------------------ #

def mlp_forward(x, kp):
    feat = x.reshape(-1, IN_FEATURES)                     # x.view(-1, 784)
    B = feat.shape[0]
    tb = B if B <= TB_MAX else TB_MAX                     # full block or 256-row tiles
    grid = (pl.cdiv(B, tb),)
    return pl.pallas_call(
        mlp_kernel,
        out_shape=jax.ShapeDtypeStruct((B, NUM_CLASSES), jnp.float32),
        grid=grid,
        in_specs=[
            pl.BlockSpec((tb, IN_FEATURES), lambda i: (i, 0)),
            pl.BlockSpec((IN_FEATURES, HIDDEN_PAD), lambda i: (0, 0)),
            pl.BlockSpec((1, HIDDEN_PAD), lambda i: (0, 0)),
            pl.BlockSpec((HIDDEN_PAD, NUM_CLASSES), lambda i: (0, 0)),
            pl.BlockSpec((1, NUM_CLASSES), lambda i: (0, 0)),
        ],
        out_specs=pl.BlockSpec((tb, NUM_CLASSES), lambda i: (i, 0)),
        compiler_params=pltpu.CompilerParams(
            dimension_semantics=("parallel",)),
    )(feat, kp["w1"], kp["b1"], kp["w2"], kp["b2"])


# ------------------------- parameters (deterministic) ----------------------- #

def init_params(key):
    k1, k2, k3, k4 = jax.random.split(key, 4)
    return {
        "fc_w": 0.05 * jax.random.normal(k1, (HIDDEN, IN_FEATURES), jnp.float32),
        "fc_b": 0.10 * jax.random.normal(k2, (HIDDEN,), jnp.float32),
        "fc2_w": 0.10 * jax.random.normal(k3, (NUM_CLASSES, HIDDEN), jnp.float32),
        "fc2_b": 0.10 * jax.random.normal(k4, (NUM_CLASSES,), jnp.float32),
    }


def fold_params(p):
    # Transpose to (in, out) and zero-pad hidden 20 -> 128 so the intermediate
    # activation is lane-dense. Padded columns get zero weight + zero bias, so
    # relu(0) = 0 feeds zero rows of w2 -> result is numerically identical.
    w1 = jnp.zeros((IN_FEATURES, HIDDEN_PAD), jnp.float32)
    w1 = w1.at[:, :HIDDEN].set(p["fc_w"].T)
    b1 = jnp.zeros((1, HIDDEN_PAD), jnp.float32).at[0, :HIDDEN].set(p["fc_b"])
    w2 = jnp.zeros((HIDDEN_PAD, NUM_CLASSES), jnp.float32)
    w2 = w2.at[:HIDDEN, :].set(p["fc2_w"].T)
    b2 = p["fc2_b"].reshape(1, NUM_CLASSES)
    return {"w1": w1, "b1": b1, "w2": w2, "b2": b2}


# ----------------------------- pure-JAX reference --------------------------- #

def reference_forward(x, p):
    feat = x.reshape(-1, IN_FEATURES)
    h = jax.nn.relu(jnp.dot(feat, p["fc_w"].T,
                            precision=jax.lax.Precision.HIGHEST) + p["fc_b"])
    return jnp.dot(h, p["fc2_w"].T,
                   precision=jax.lax.Precision.HIGHEST) + p["fc2_b"]


# ----------------------------------- main ----------------------------------- #

if __name__ == "__main__":
    key = jax.random.PRNGKey(0)
    kx, kp = jax.random.split(key)
    B = 2
    x = jax.random.normal(kx, (B, 1, 28, 28), jnp.float32)   # view(-1,784) -> (2,784)

    raw = init_params(kp)
    kparams = fold_params(raw)

    out = jax.jit(mlp_forward)(x, kparams)
    out = jax.block_until_ready(out)

    ref = reference_forward(x, raw)
    if not jnp.allclose(out, ref, rtol=1e-3, atol=1e-3):
        raise SystemExit(
            f"mismatch: max abs err {float(jnp.max(jnp.abs(out - ref)))}")
    print("KERNEL_OK")
</pallas_src>

<mosaic_0001>
module attributes {stable_mosaic.version = 11 : i64} {
  func.func @mlp_kernel(%arg0: i32, %arg1: memref<2x784xf32, #tpu.memory_space<vmem>>, %arg2: memref<784x128xf32, #tpu.memory_space<vmem>>, %arg3: memref<1x128xf32, #tpu.memory_space<vmem>>, %arg4: memref<128x10xf32, #tpu.memory_space<vmem>>, %arg5: memref<1x10xf32, #tpu.memory_space<vmem>>, %arg6: memref<2x10xf32, #tpu.memory_space<vmem>>) attributes {dimension_semantics = [#tpu.dimension_semantics<parallel>], iteration_bounds = array<i64: 1>, scalar_prefetch = 0 : i64, scratch_operands = 0 : i64, tpu.core_type = #tpu.core_type<tc>, window_params = [{transform_indices = @transform_0, window_bounds = array<i64: 2, 784>}, {pipeline_mode = #tpu.pipeline_mode<synchronous>, transform_indices = @transform_1, window_bounds = array<i64: 784, 128>}, {pipeline_mode = #tpu.pipeline_mode<synchronous>, transform_indices = @transform_2, window_bounds = array<i64: 1, 128>}, {pipeline_mode = #tpu.pipeline_mode<synchronous>, transform_indices = @transform_3, window_bounds = array<i64: 128, 10>}, {pipeline_mode = #tpu.pipeline_mode<synchronous>, transform_indices = @transform_4, window_bounds = array<i64: 1, 10>}, {transform_indices = @transform_5, window_bounds = array<i64: 2, 10>}]} {
    %c0 = arith.constant 0 : index
    %c0_0 = arith.constant 0 : index
    %0 = vector.load %arg1[%c0, %c0_0] : memref<2x784xf32, #tpu.memory_space<vmem>>, vector<2x784xf32>
    %c0_1 = arith.constant 0 : index
    %c0_2 = arith.constant 0 : index
    %1 = vector.load %arg2[%c0_1, %c0_2] : memref<784x128xf32, #tpu.memory_space<vmem>>, vector<784x128xf32>
    %cst = arith.constant dense<0.000000e+00> : vector<2x128xf32>
    %2 = tpu.matmul %0, %1, %cst {dimension_numbers = #tpu.dot_dimension_numbers<[1], [0], [0], [1], [0, 0, 1, 1], [], []>} : vector<2x784xf32>, vector<784x128xf32>, vector<2x128xf32> -> vector<2x128xf32>
    %c0_3 = arith.constant 0 : index
    %c0_4 = arith.constant 0 : index
    %3 = vector.load %arg3[%c0_3, %c0_4] : memref<1x128xf32, #tpu.memory_space<vmem>>, vector<1x128xf32>
    %4 = vector.broadcast %3 : vector<1x128xf32> to vector<2x128xf32>
    %5 = arith.addf %2, %4 : vector<2x128xf32>
    %cst_5 = arith.constant 0.000000e+00 : f32
    %6 = vector.broadcast %cst_5 : f32 to vector<2x128xf32>
    %7 = arith.maximumf %5, %6 : vector<2x128xf32>
    %c0_6 = arith.constant 0 : index
    %c0_7 = arith.constant 0 : index
    %8 = vector.load %arg4[%c0_6, %c0_7] : memref<128x10xf32, #tpu.memory_space<vmem>>, vector<128x10xf32>
    %cst_8 = arith.constant dense<0.000000e+00> : vector<2x10xf32>
    %9 = tpu.matmul %7, %8, %cst_8 {dimension_numbers = #tpu.dot_dimension_numbers<[1], [0], [0], [1], [0, 0, 1, 1], [], []>} : vector<2x128xf32>, vector<128x10xf32>, vector<2x10xf32> -> vector<2x10xf32>
    %c0_9 = arith.constant 0 : index
    %c0_10 = arith.constant 0 : index
    %10 = vector.load %arg5[%c0_9, %c0_10] : memref<1x10xf32, #tpu.memory_space<vmem>>, vector<1x10xf32>
    %11 = vector.broadcast %10 : vector<1x10xf32> to vector<2x10xf32>
    %12 = arith.addf %9, %11 : vector<2x10xf32>
    %c0_11 = arith.constant 0 : index
    %c0_12 = arith.constant 0 : index
    %13 = vector.load %arg6[%c0_11, %c0_12] : memref<2x10xf32, #tpu.memory_space<vmem>>, vector<2x10xf32>
    tpu.vector_store %arg6[%c0_11, %c0_12], %12 {strides = array<i32>} : memref<2x10xf32, #tpu.memory_space<vmem>>, vector<2x10xf32>,
    return
  }
  func.func @transform_0(%arg0: i32) -> (i32, i32) {
    %c0_i32 = arith.constant 0 : i32
    %c0_i32_0 = arith.constant 0 : i32
    return %arg0, %c0_i32 : i32, i32
  }
  func.func @transform_1(%arg0: i32) -> (i32, i32) {
    %c0_i32 = arith.constant 0 : i32
    %c0_i32_0 = arith.constant 0 : i32
    %c0_i32_1 = arith.constant 0 : i32
    return %c0_i32, %c0_i32_0 : i32, i32
  }
  func.func @transform_2(%arg0: i32) -> (i32, i32) {
    %c0_i32 = arith.constant 0 : i32
    %c0_i32_0 = arith.constant 0 : i32
    %c0_i32_1 = arith.constant 0 : i32
    return %c0_i32, %c0_i32_0 : i32, i32
  }
  func.func @transform_3(%arg0: i32) -> (i32, i32) {
    %c0_i32 = arith.constant 0 : i32
    %c0_i32_0 = arith.constant 0 : i32
    %c0_i32_1 = arith.constant 0 : i32
    return %c0_i32, %c0_i32_0 : i32, i32
  }
  func.func @transform_4(%arg0: i32) -> (i32, i32) {
    %c0_i32 = arith.constant 0 : i32
    %c0_i32_0 = arith.constant 0 : i32
    %c0_i32_1 = arith.constant 0 : i32
    return %c0_i32, %c0_i32_0 : i32, i32
  }
  func.func @transform_5(%arg0: i32) -> (i32, i32) {
    %c0_i32 = arith.constant 0 : i32
    %c0_i32_0 = arith.constant 0 : i32
    return %arg0, %c0_i32 : i32, i32
  }
}

</mosaic_0001>

<llo_original>
// kernel: mlp_forward.1
$region0: #{mlp_forward.1}
  #allocation0 [shape = 'u32[]', space=smem, size = 0x4, offset = 0x4, fixed_abs, tag = 'smem constant byte address 0x4 - core index']
  #allocation1 [shape = 'u32[72,128]{1,0:T(1,128)}', space=vmem, size = 0x9000, scoped, tag = 'internal scratch']
  %s0 = inlined_call_operand.vmem [shape: f32[2,784], index: 0, kind: input, shape index: {}]
  %s1 = inlined_call_operand.hbm [shape: f32[784,128], index: 1, kind: input, shape index: {}]
  %s2 = inlined_call_operand.vmem [shape: f32[1,128], index: 2, kind: input, shape index: {}]
  %s3 = inlined_call_operand.vmem [shape: f32[128,10], index: 3, kind: input, shape index: {}]
  %s4 = inlined_call_operand.vmem [shape: f32[1,10], index: 4, kind: input, shape index: {}]
  %s5 = inlined_call_operand.hbm [shape: f32[2,10], index: 5, kind: output, shape index: {}]
  %s6 = sld [smem:[#allocation0]]
  $region34: #{mlp_forward.1} parent=0
    _
  %s8 = ssub.s32 1, %s6
  %s9 = scalar_select 0, %s8, %s6
  $region1: #{mlp_forward.1} parent=0
    #allocation2 [shape = 'u8[401408]{0}', space=vmem, size = 0x62000, scoped, tag = 'input window, operand 1, single buffered']
    #allocation3 [shape = 's32[1]{0}', space=sflag, size = 0x4, scoped, tag = 'scoped memory for mlp_forward.1']
    #allocation4 [shape = 's32[1]{0}', space=sflag, size = 0x4, scoped, tag = 'scoped memory for mlp_forward.1']
    #allocation5 [shape = 'u8[1024]{0}', space=vmem, size = 0x400, scoped, tag = 'output window, operand 0, single buffered']
    %10 = vsyncpa [#allocation3], 0
    %11 = vsyncpa [#allocation4], 0
    // Predicated region
    $region2: #{mlp_forward.1} parent=1 // pred_check
      _
    $region3: #{mlp_forward.1} parent=1 // pred_check_branch
      %13 = sbr.rel (0) target = $region5
    $region4: #{mlp_forward.1} parent=1 // pred_region
      _
    $region5: #{mlp_forward.1} parent=1 // pred_fallthru
      _
    // Predicated region
    $region6: #{mlp_forward.1} parent=1 // pred_check
      _
    $region7: #{mlp_forward.1} parent=1 // pred_check_branch
      %15 = sbr.rel (0) target = $region9
    $region8: #{mlp_forward.1} parent=1 // pred_region
      %17 = vsyncadd [#allocation3], 0
      %s18 = sshll.u32 %s1, 4
      %s19 = int_to_ptr.hbm [resolvable:$true] %s18
      %s20 = sshll.u32 [#allocation2], 4
      %s21 = int_to_ptr.vmem [resolvable:$true] %s20
      %26 = dma.hbm_to_vmem [thread:$0]  %s19, 12544, %s21, [#allocation3], 128, 128, 8
    $region9: #{mlp_forward.1} parent=1 // pred_fallthru
      _
    // Predicated region
    $region10: #{mlp_forward.1} parent=1 // pred_check
      _
    $region11: #{mlp_forward.1} parent=1 // pred_check_branch
      %28 = sbr.rel (0) target = $region13
    $region12: #{mlp_forward.1} parent=1 // pred_region
      _
    $region13: #{mlp_forward.1} parent=1 // pred_fallthru
      _
    // Predicated region
    $region14: #{mlp_forward.1} parent=1 // pred_check
      _
    $region15: #{mlp_forward.1} parent=1 // pred_check_branch
      %30 = sbr.rel (0) target = $region17
    $region16: #{mlp_forward.1} parent=1 // pred_region
      _
    $region17: #{mlp_forward.1} parent=1 // pred_fallthru
      _
    // Predicated region
    $region18: #{mlp_forward.1} parent=1 // pred_check
      _
    $region19: #{mlp_forward.1} parent=1 // pred_check_branch
      %32 = sbr.rel (0) target = $region21
    $region20: #{mlp_forward.1} parent=1 // pred_region
      _
    $region21: #{mlp_forward.1} parent=1 // pred_fallthru
      _
    // Predicated region
    $region22: #{mlp_forward.1} parent=1 // pred_check
      _
    $region23: #{mlp_forward.1} parent=1 // pred_check_branch
      %34 = sbr.rel (0) target = $region25
    $region24: #{mlp_forward.1} parent=1 // pred_region
      %36 = dma.done [#allocation3], 12544
    $region25: #{mlp_forward.1} parent=1 // pred_fallthru
      _
    %v37 = vld [vmem:[%s0] sm:$0xff]
    %v38 = vld [vmem:[%s0 + $0x8] sm:$0x3f]
    %v39 = vld [vmem:[#allocation2] sm:$0xff]
    %v40 = vld [vmem:[#allocation2 + $0x8] sm:$0xff]
    %v41 = vld [vmem:[#allocation2 + $0x10] sm:$0xff]
    %v42 = vld [vmem:[#allocation2 + $0x18] sm:$0xff]
    %v43 = vld [vmem:[#allocation2 + $0x20] sm:$0xff]
    %v44 = vld [vmem:[#allocation2 + $0x28] sm:$0xff]
    %v45 = vld [vmem:[#allocation2 + $0x30] sm:$0xff]
    %v46 = vld [vmem:[#allocation2 + $0x38] sm:$0xff]
    %v47 = vld [vmem:[#allocation2 + $0x40] sm:$0xff]
    %v48 = vld [vmem:[#allocation2 + $0x48] sm:$0xff]
    %v49 = vld [vmem:[#allocation2 + $0x50] sm:$0xff]
    %v50 = vld [vmem:[#allocation2 + $0x58] sm:$0xff]
    %v51 = vld [vmem:[#allocation2 + $0x60] sm:$0xff]
    %v52 = vld [vmem:[#allocation2 + $0x68] sm:$0xff]
    %v53 = vld [vmem:[#allocation2 + $0x70] sm:$0xff]
    %v54 = vld [vmem:[#allocation2 + $0x78] sm:$0xff]
    %v55 = vld [vmem:[#allocation2 + $0x80] sm:$0xff]
    %v56 = vld [vmem:[#allocation2 + $0x88] sm:$0xff]
    %v57 = vld [vmem:[#allocation2 + $0x90] sm:$0xff]
    %v58 = vld [vmem:[#allocation2 + $0x98] sm:$0xff]
    %v59 = vld [vmem:[#allocation2 + $0xa0] sm:$0xff]
    %v60 = vld [vmem:[#allocation2 + $0xa8] sm:$0xff]
    %v61 = vld [vmem:[#allocation2 + $0xb0] sm:$0xff]
    %v62 = vld [vmem:[#allocation2 + $0xb8] sm:$0xff]
    %v63 = vld [vmem:[#allocation2 + $0xc0] sm:$0xff]
    %v64 = vld [vmem:[#allocation2 + $0xc8] sm:$0xff]
    %v65 = vld [vmem:[#allocation2 + $0xd0] sm:$0xff]
    %v66 = vld [vmem:[#allocation2 + $0xd8] sm:$0xff]
    %v67 = vld [vmem:[#allocation2 + $0xe0] sm:$0xff]
    %v68 = vld [vmem:[#allocation2 + $0xe8] sm:$0xff]
    %v69 = vld [vmem:[#allocation2 + $0xf0] sm:$0xff]
    %v70 = vld [vmem:[#allocation2 + $0xf8] sm:$0xff]
    %v71 = vld [vmem:[#allocation2 + $0x100] sm:$0xff]
    %v72 = vld [vmem:[#allocation2 + $0x108] sm:$0xff]
    %v73 = vld [vmem:[#allocation2 + $0x110] sm:$0xff]
    %v74 = vld [vmem:[#allocation2 + $0x118] sm:$0xff]
    %v75 = vld [vmem:[#allocation2 + $0x120] sm:$0xff]
    %v76 = vld [vmem:[#allocation2 + $0x128] sm:$0xff]
    %v77 = vld [vmem:[#allocation2 + $0x130] sm:$0xff]
    %v78 = vld [vmem:[#allocation2 + $0x138] sm:$0xff]
    %v79 = vld [vmem:[#allocation2 + $0x140] sm:$0xff]
    %v80 = vld [vmem:[#allocation2 + $0x148] sm:$0xff]
    %v81 = vld [vmem:[#allocation2 + $0x150] sm:$0xff]
    %v82 = vld [vmem:[#allocation2 + $0x158] sm:$0xff]
    %v83 = vld [vmem:[#allocation2 + $0x160] sm:$0xff]
    %v84 = vld [vmem:[#allocation2 + $0x168] sm:$0xff]
    %v85 = vld [vmem:[#allocation2 + $0x170] sm:$0xff]
    %v86 = vld [vmem:[#allocation2 + $0x178] sm:$0xff]
    %v87 = vld [vmem:[#allocation2 + $0x180] sm:$0xff]
    %v88 = vld [vmem:[#allocation2 + $0x188] sm:$0xff]
    %v89 = vld [vmem:[#allocation2 + $0x190] sm:$0xff]
    %v90 = vld [vmem:[#allocation2 + $0x198] sm:$0xff]
    %v91 = vld [vmem:[#allocation2 + $0x1a0] sm:$0xff]
    %v92 = vld [vmem:[#allocation2 + $0x1a8] sm:$0xff]
    %v93 = vld [vmem:[#allocation2 + $0x1b0] sm:$0xff]
    %v94 = vld [vmem:[#allocation2 + $0x1b8] sm:$0xff]
    %v95 = vld [vmem:[#allocation2 + $0x1c0] sm:$0xff]
    %v96 = vld [vmem:[#allocation2 + $0x1c8] sm:$0xff]
    %v97 = vld [vmem:[#allocation2 + $0x1d0] sm:$0xff]
    %v98 = vld [vmem:[#allocation2 + $0x1d8] sm:$0xff]
    %v99 = vld [vmem:[#allocation2 + $0x1e0] sm:$0xff]
    %v100 = vld [vmem:[#allocation2 + $0x1e8] sm:$0xff]
    %v101 = vld [vmem:[#allocation2 + $0x1f0] sm:$0xff]
    %v102 = vld [vmem:[#allocation2 + $0x1f8] sm:$0xff]
    %v103 = vld [vmem:[#allocation2 + $0x200] sm:$0xff]
    %v104 = vld [vmem:[#allocation2 + $0x208] sm:$0xff]
    %v105 = vld [vmem:[#allocation2 + $0x210] sm:$0xff]
    %v106 = vld [vmem:[#allocation2 + $0x218] sm:$0xff]
    %v107 = vld [vmem:[#allocation2 + $0x220] sm:$0xff]
    %v108 = vld [vmem:[#allocation2 + $0x228] sm:$0xff]
    %v109 = vld [vmem:[#allocation2 + $0x230] sm:$0xff]
    %v110 = vld [vmem:[#allocation2 + $0x238] sm:$0xff]
    %v111 = vld [vmem:[#allocation2 + $0x240] sm:$0xff]
    %v112 = vld [vmem:[#allocation2 + $0x248] sm:$0xff]
    %v113 = vld [vmem:[#allocation2 + $0x250] sm:$0xff]
    %v114 = vld [vmem:[#allocation2 + $0x258] sm:$0xff]
    %v115 = vld [vmem:[#allocation2 + $0x260] sm:$0xff]
    %v116 = vld [vmem:[#allocation2 + $0x268] sm:$0xff]
    %v117 = vld [vmem:[#allocation2 + $0x270] sm:$0xff]
    %v118 = vld [vmem:[#allocation2 + $0x278] sm:$0xff]
    %v119 = vld [vmem:[#allocation2 + $0x280] sm:$0xff]
    %v120 = vld [vmem:[#allocation2 + $0x288] sm:$0xff]
    %v121 = vld [vmem:[#allocation2 + $0x290] sm:$0xff]
    %v122 = vld [vmem:[#allocation2 + $0x298] sm:$0xff]
    %v123 = vld [vmem:[#allocation2 + $0x2a0] sm:$0xff]
    %v124 = vld [vmem:[#allocation2 + $0x2a8] sm:$0xff]
    %v125 = vld [vmem:[#allocation2 + $0x2b0] sm:$0xff]
    %v126 = vld [vmem:[#allocation2 + $0x2b8] sm:$0xff]
    %v127 = vld [vmem:[#allocation2 + $0x2c0] sm:$0xff]
    %v128 = vld [vmem:[#allocation2 + $0x2c8] sm:$0xff]
    %v129 = vld [vmem:[#allocation2 + $0x2d0] sm:$0xff]
    %v130 = vld [vmem:[#allocation2 + $0x2d8] sm:$0xff]
    %v131 = vld [vmem:[#allocation2 + $0x2e0] sm:$0xff]
    %v132 = vld [vmem:[#allocation2 + $0x2e8] sm:$0xff]
    %v133 = vld [vmem:[#allocation2 + $0x2f0] sm:$0xff]
    %v134 = vld [vmem:[#allocation2 + $0x2f8] sm:$0xff]
    %v135 = vld [vmem:[#allocation2 + $0x300] sm:$0xff]
    %v136 = vld [vmem:[#allocation2 + $0x308] sm:$0xff]
    %v137 = vld [vmem:[%s2] sm:$0x1]
    %v139 = vperm.slane %v137, 0
    %143 = vst [vmem:[#allocation1] ss:$4 sm:$0xff] %v37
    %s144 = scalar_lea.vmem [#allocation1], 32
    %145 = vst [vmem:[%s144] ss:$4 sm:$0xff] %v38
    %v146 = vld.sshfl [vmem:[#allocation1] sm:$0xff pattern:$0x73625140]
    %v147 = vld.sshfl [vmem:[#allocation1 + $0x8] sm:$0xff pattern:$0x73625140]
    %v148 = vld.sshfl [vmem:[#allocation1 + $0x10] sm:$0xff pattern:$0x73625140]
    %v149 = vld.sshfl [vmem:[#allocation1 + $0x18] sm:$0xff pattern:$0x73625140]
    %v150 = vld.sshfl [vmem:[#allocation1 + $0x20] sm:$0xff pattern:$0x73625140]
    %v151 = vld.sshfl [vmem:[#allocation1 + $0x28] sm:$0xff pattern:$0x73625140]
    %v152 = vld.sshfl [vmem:[#allocation1 + $0x30] sm:$0xff pattern:$0x73625140]
    %vm159 = vcmask 130048
    %v160 = vsel %vm159, %v152, 0
    %162 = vmatpush.msra.mxu0 %v54
    %163 = vmatpush.msra.mxu0 %v53
    %164 = vmatpush.msra.mxu0 %v52
    %165 = vmatpush.msra.mxu0 %v51
    %166 = vmatpush.msra.mxu0 %v50
    %167 = vmatpush.msra.mxu0 %v49
    %168 = vmatpush.msra.mxu0 %v48
    %169 = vmatpush.msra.mxu0 %v47
    %170 = vmatpush.msra.mxu0 %v46
    %171 = vmatpush.msra.mxu0 %v45
    %172 = vmatpush.msra.mxu0 %v44
    %173 = vmatpush.msra.mxu0 %v43
    %174 = vmatpush.msra.mxu0 %v42
    %175 = vmatpush.msra.mxu0 %v41
    %176 = vmatpush.msra.mxu0 %v40
    %177 = vmatpush.msra.mxu0 %v39
    %178 = vmatmul.f32.gmra.mxu0 %v146
    %v179 = vpop.f32.mrf.mxu0
    %v180 = vadd.f32 %v139, %v179
    %181 = vdwg.mxu0
    %182 = vmatpush.msra.mxu0 %v70
    %183 = vmatpush.msra.mxu0 %v69
    %184 = vmatpush.msra.mxu0 %v68
    %185 = vmatpush.msra.mxu0 %v67
    %186 = vmatpush.msra.mxu0 %v66
    %187 = vmatpush.msra.mxu0 %v65
    %188 = vmatpush.msra.mxu0 %v64
    %189 = vmatpush.msra.mxu0 %v63
    %190 = vmatpush.msra.mxu0 %v62
    %191 = vmatpush.msra.mxu0 %v61
    %192 = vmatpush.msra.mxu0 %v60
    %193 = vmatpush.msra.mxu0 %v59
    %194 = vmatpush.msra.mxu0 %v58
    %195 = vmatpush.msra.mxu0 %v57
    %196 = vmatpush.msra.mxu0 %v56
    %197 = vmatpush.msra.mxu0 %v55
    %198 = vmatmul.f32.gmra.mxu0 %v147
    %v199 = vpop.f32.mrf.mxu0
    %v200 = vadd.f32 %v180, %v199
    %201 = vdwg.mxu0
    %202 = vmatpush.msra.mxu0 %v86
    %203 = vmatpush.msra.mxu0 %v85
    %204 = vmatpush.msra.mxu0 %v84
    %205 = vmatpush.msra.mxu0 %v83
    %206 = vmatpush.msra.mxu0 %v82
    %207 = vmatpush.msra.mxu0 %v81
    %208 = vmatpush.msra.mxu0 %v80
    %209 = vmatpush.msra.mxu0 %v79
    %210 = vmatpush.msra.mxu0 %v78
    %211 = vmatpush.msra.mxu0 %v77
    %212 = vmatpush.msra.mxu0 %v76
    %213 = vmatpush.msra.mxu0 %v75
    %214 = vmatpush.msra.mxu0 %v74
    %215 = vmatpush.msra.mxu0 %v73
    %216 = vmatpush.msra.mxu0 %v72
    %217 = vmatpush.msra.mxu0 %v71
    %218 = vmatmul.f32.gmra.mxu0 %v148
    %v219 = vpop.f32.mrf.mxu0
    %v220 = vadd.f32 %v200, %v219
    %221 = vdwg.mxu0
    %222 = vmatpush.msra.mxu0 %v102
    %223 = vmatpush.msra.mxu0 %v101
    %224 = vmatpush.msra.mxu0 %v100
    %225 = vmatpush.msra.mxu0 %v99
    %226 = vmatpush.msra.mxu0 %v98
    %227 = vmatpush.msra.mxu0 %v97
    %228 = vmatpush.msra.mxu0 %v96
    %229 = vmatpush.msra.mxu0 %v95
    %230 = vmatpush.msra.mxu0 %v94
    %231 = vmatpush.msra.mxu0 %v93
    %232 = vmatpush.msra.mxu0 %v92
    %233 = vmatpush.msra.mxu0 %v91
    %234 = vmatpush.msra.mxu0 %v90
    %235 = vmatpush.msra.mxu0 %v89
    %236 = vmatpush.msra.mxu0 %v88
    %237 = vmatpush.msra.mxu0 %v87
    %238 = vmatmul.f32.gmra.mxu0 %v149
    %v239 = vpop.f32.mrf.mxu0
    %v240 = vadd.f32 %v220, %v239
    %241 = vdwg.mxu0
    %242 = vmatpush.msra.mxu0 %v118
    %243 = vmatpush.msra.mxu0 %v117
    %244 = vmatpush.msra.mxu0 %v116
    %245 = vmatpush.msra.mxu0 %v115
    %246 = vmatpush.msra.mxu0 %v114
    %247 = vmatpush.msra.mxu0 %v113
    %248 = vmatpush.msra.mxu0 %v112
    %249 = vmatpush.msra.mxu0 %v111
    %250 = vmatpush.msra.mxu0 %v110
    %251 = vmatpush.msra.mxu0 %v109
    %252 = vmatpush.msra.mxu0 %v108
    %253 = vmatpush.msra.mxu0 %v107
    %254 = vmatpush.msra.mxu0 %v106
    %255 = vmatpush.msra.mxu0 %v105
    %256 = vmatpush.msra.mxu0 %v104
    %257 = vmatpush.msra.mxu0 %v103
    %258 = vmatmul.f32.gmra.mxu0 %v150
    %v259 = vpop.f32.mrf.mxu0
    %v260 = vadd.f32 %v240, %v259
    %261 = vdwg.mxu0
    %262 = vmatpush.msra.mxu0 %v134
    %263 = vmatpush.msra.mxu0 %v133
    %264 = vmatpush.msra.mxu0 %v132
    %265 = vmatpush.msra.mxu0 %v131
    %266 = vmatpush.msra.mxu0 %v130
    %267 = vmatpush.msra.mxu0 %v129
    %268 = vmatpush.msra.mxu0 %v128
    %269 = vmatpush.msra.mxu0 %v127
    %270 = vmatpush.msra.mxu0 %v126
    %271 = vmatpush.msra.mxu0 %v125
    %272 = vmatpush.msra.mxu0 %v124
    %273 = vmatpush.msra.mxu0 %v123
    %274 = vmatpush.msra.mxu0 %v122
    %275 = vmatpush.msra.mxu0 %v121
    %276 = vmatpush.msra.mxu0 %v120
    %277 = vmatpush.msra.mxu0 %v119
    %278 = vmatmul.f32.gmra.mxu0 %v151
    %v279 = vpop.f32.mrf.mxu0
    %v280 = vadd.f32 %v260, %v279
    %281 = vdwg.mxu0
    %282 = vmatpush.msra.mxu0 0.0
    %283 = vmatpush.msra.mxu0 0.0
    %284 = vmatpush.msra.mxu0 0.0
    %285 = vmatpush.msra.mxu0 0.0
    %286 = vmatpush.msra.mxu0 0.0
    %287 = vmatpush.msra.mxu0 0.0
    %288 = vmatpush.msra.mxu0 0.0
    %289 = vmatpush.msra.mxu0 0.0
    %290 = vmatpush.msra.mxu0 0.0
    %291 = vmatpush.msra.mxu0 0.0
    %292 = vmatpush.msra.mxu0 0.0
    %293 = vmatpush.msra.mxu0 0.0
    %294 = vmatpush.msra.mxu0 0.0
    %295 = vmatpush.msra.mxu0 0.0
    %296 = vmatpush.msra.mxu0 %v136
    %297 = vmatpush.msra.mxu0 %v135
    %298 = vmatmul.f32.gmra.mxu0 %v160
    %v299 = vpop.f32.mrf.mxu0
    %v300 = vadd.f32 %v280, %v299
    %301 = vdwg.mxu0
    %v302 = vmax.f32 %v300, 0.0
    %v303 = vld [vmem:[%s3] sm:$0xff]
    %v304 = vld [vmem:[%s3 + $0x8] sm:$0xff]
    %v305 = vld [vmem:[%s3 + $0x10] sm:$0xff]
    %v306 = vld [vmem:[%s3 + $0x18] sm:$0xff]
    %v307 = vld [vmem:[%s3 + $0x20] sm:$0xff]
    %v308 = vld [vmem:[%s3 + $0x28] sm:$0xff]
    %v309 = vld [vmem:[%s3 + $0x30] sm:$0xff]
    %v310 = vld [vmem:[%s3 + $0x38] sm:$0xff]
    %v311 = vld [vmem:[%s3 + $0x40] sm:$0xff]
    %v312 = vld [vmem:[%s3 + $0x48] sm:$0xff]
    %v313 = vld [vmem:[%s3 + $0x50] sm:$0xff]
    %v314 = vld [vmem:[%s3 + $0x58] sm:$0xff]
    %v315 = vld [vmem:[%s3 + $0x60] sm:$0xff]
    %v316 = vld [vmem:[%s3 + $0x68] sm:$0xff]
    %v317 = vld [vmem:[%s3 + $0x70] sm:$0xff]
    %v318 = vld [vmem:[%s3 + $0x78] sm:$0xff]
    %v319 = vld [vmem:[%s4] sm:$0x1]
    %v321 = vperm.slane %v319, 0
    %323 = vmatpush.msra.mxu0 %v318
    %324 = vmatpush.msra.mxu0 %v317
    %325 = vmatpush.msra.mxu0 %v316
    %326 = vmatpush.msra.mxu0 %v315
    %327 = vmatpush.msra.mxu0 %v314
    %328 = vmatpush.msra.mxu0 %v313
    %329 = vmatpush.msra.mxu0 %v312
    %330 = vmatpush.msra.mxu0 %v311
    %331 = vmatpush.msra.mxu0 %v310
    %332 = vmatpush.msra.mxu0 %v309
    %333 = vmatpush.msra.mxu0 %v308
    %334 = vmatpush.msra.mxu0 %v307
    %335 = vmatpush.msra.mxu0 %v306
    %336 = vmatpush.msra.mxu0 %v305
    %337 = vmatpush.msra.mxu0 %v304
    %338 = vmatpush.msra.mxu0 %v303
    %339 = vmatmul.f32.gmra.mxu0 %v302
    %v340 = vpop.f32.mrf.mxu0
    %v341 = vadd.f32 %v321, %v340
    %342 = vdwg.mxu0
    %vm343 = vcmask 74752
    %344 = vst.msk [vmem:[#allocation5] sm:$0x3] %vm343, %v341
    // Predicated region
    $region26: #{mlp_forward.1} parent=1 // pred_check
      _
    $region27: #{mlp_forward.1} parent=1 // pred_check_branch
      %346 = sbr.rel (0) target = $region29
    $region28: #{mlp_forward.1} parent=1 // pred_region
      %348 = vsyncadd [#allocation4], 0
      %s350 = sshll.u32 [#allocation5], 4
      %s351 = int_to_ptr.vmem [resolvable:$true] %s350
      %s352 = sshll.u32 %s5, 4
      %s353 = int_to_ptr.hbm [resolvable:$true] %s352
      %355 = dma.vmem_to_hbm [thread:$0]  %s351, 32, %s353, [#allocation4]
    $region29: #{mlp_forward.1} parent=1 // pred_fallthru
      _
    // Predicated region
    $region30: #{mlp_forward.1} parent=1 // pred_check
      _
    $region31: #{mlp_forward.1} parent=1 // pred_check_branch
      %357 = sbr.rel (0) target = $region33
    $region32: #{mlp_forward.1} parent=1 // pred_region
      %359 = dma.done [#allocation4], 32
    $region33: #{mlp_forward.1} parent=1 // pred_fallthru
      _
    %360 = vsyncpa [#allocation3], 1
    %361 = vsyncpa [#allocation4], 1

</llo_original>
